<compile_context>
chip_gen: v7x
topology: tpu7x:2x2x1
jax: 0.10.0
libtpu: 0.0.40
codegen_flags: <defaults>
</compile_context>

<pallas_src>
import functools

import jax
import jax.numpy as jnp
from jax import lax
from jax.experimental import pallas as pl
from jax.experimental.pallas import tpu as pltpu


_EPS = 1e-12            # F.normalize default eps (clamp_min on the norm)
_EPS_SQ = _EPS * _EPS   # equivalent clamp applied to the squared norm


def _cosface_kernel(emb_ref, w_ref, labels_ref, out_ref, *,
                    scale_times_margin, training, tile_c):
    # Cosine-numerator matmul: contract on E for BOTH operands (both tiles are
    # lane-major on E, so no w.T materialization is needed).  The wrapper has
    # already normalized both operands and (in training) folded `scale` into
    # the weights, so `raw` is directly the scaled cosine logits tile.
    raw = lax.dot_general(
        emb_ref[...], w_ref[...],
        dimension_numbers=(((1,), (1,)), ((), ())),
        preferred_element_type=jnp.float32)                       # (TB, TC) f32

    if training:
        # Margin: subtract scale*margin at the label column of this class tile.
        # Shift the (TB,1) labels by the tile origin instead of offsetting the
        # full (TB,TC) iota.
        col0 = pl.program_id(0) * tile_c                          # class tiles lead
        local_labels = labels_ref[...] - col0                     # (TB, 1) int32
        col_ids = lax.broadcasted_iota(jnp.int32, raw.shape, 1)   # (TB, TC)
        raw = raw - jnp.where(col_ids == local_labels,
                              jnp.float32(scale_times_margin),
                              jnp.float32(0.0))

    out_ref[...] = raw.astype(out_ref.dtype)


def cosface_margin_loss(embeddings, labels, weights, *, scale=32.0, margin=0.1,
                        training=True, tile_b=None, tile_c=None,
                        matmul_dtype=jnp.bfloat16):
    """embeddings: (B, E), labels: (B,), weights: (C, E) -> logits (B, C) f32."""
    B, E = embeddings.shape
    C, E2 = weights.shape
    assert E == E2, "embedding size mismatch"

    # ---- wrapper prep: normalize, fold scale, cast to matmul dtype ----------
    emb32 = embeddings.astype(jnp.float32)
    emb_n = emb32 * lax.rsqrt(
        jnp.maximum(jnp.sum(emb32 * emb32, axis=-1, keepdims=True),
                    jnp.float32(_EPS_SQ)))
    w32 = weights.astype(jnp.float32)
    w_n = w32 * lax.rsqrt(
        jnp.maximum(jnp.sum(w32 * w32, axis=-1, keepdims=True),
                    jnp.float32(_EPS_SQ)))
    if training:
        w_n = w_n * jnp.float32(scale)      # fold scale into the weight stream
    if matmul_dtype is not None:
        emb_n = emb_n.astype(matmul_dtype)
        w_n = w_n.astype(matmul_dtype)

    labels2d = labels.reshape(B, 1).astype(jnp.int32)

    itemsize = jnp.dtype(emb_n.dtype).itemsize

    # ---- generation-aware VMEM budget & tile selection ----------------------
    try:
        vmem_cap = int(pltpu.get_tpu_info().vmem_capacity_bytes)
    except Exception:
        vmem_cap = 64 * 1024 * 1024         # conservative (v7x per-TC VMEM)
    vmem_budget = int(0.80 * vmem_cap)

    if tile_b is None:
        tile_b = B if B <= 256 else 256
    if tile_c is None:
        # Fit the double-buffered weight block + double-buffered output tile in
        # roughly half the scoped budget; leave the rest as headroom.
        per_class_bytes = 2 * E * itemsize + 2 * tile_b * 4
        cand = max(16 << 20, vmem_budget // 2) // per_class_bytes
        if cand >= C:
            tile_c = C
        else:
            tile_c = min(4096, max(128, (int(cand) // 128) * 128))
    assert tile_b == B or tile_b % 8 == 0, "tile_b must be 8-aligned or == B"
    assert tile_c == C or tile_c % 128 == 0, "tile_c must be 128-aligned or == C"

    # Per-step footprint (everything double-buffered by BlockSpec) + headroom.
    step_bytes = (2 * tile_b * E * itemsize          # embeddings
                  + 2 * tile_c * E * itemsize        # weights
                  + 2 * tile_b * tile_c * 4          # f32 output
                  + 2 * tile_b * 128 * 4)            # labels (lane-padded)
    vmem_limit = int(min(vmem_budget, max(32 * 1024 * 1024,
                                          step_bytes + (8 << 20))))

    # Grid: class tiles LEADING (split across TCs on v7x; weight block resident),
    # batch tiles innermost (small embedding tiles sweep under each weight block),
    # so the full (C, E) weight matrix streams from HBM exactly once.
    grid = (pl.cdiv(C, tile_c), pl.cdiv(B, tile_b))

    kernel = functools.partial(
        _cosface_kernel,
        scale_times_margin=float(scale) * float(margin),
        training=bool(training),
        tile_c=int(tile_c))

    return pl.pallas_call(
        kernel,
        out_shape=jax.ShapeDtypeStruct((B, C), jnp.float32),
        grid_spec=pltpu.PrefetchScalarGridSpec(
            num_scalar_prefetch=0,
            grid=grid,
            in_specs=[
                pl.BlockSpec((tile_b, E), lambda j, i: (i, 0)),     # embeddings
                pl.BlockSpec((tile_c, E), lambda j, i: (j, 0)),     # weights
                pl.BlockSpec((tile_b, 1), lambda j, i: (i, 0)),     # labels
            ],
            out_specs=pl.BlockSpec((tile_b, tile_c), lambda j, i: (i, j)),
        ),
        compiler_params=pltpu.CompilerParams(
            dimension_semantics=("parallel", "parallel"),
            vmem_limit_bytes=vmem_limit,
        ),
    )(emb_n, w_n, labels2d)


def _reference(embeddings, labels, weights, scale=32.0, margin=0.1, training=True):
    def l2n(x):
        n = jnp.sqrt(jnp.sum(x * x, axis=-1, keepdims=True))
        return x / jnp.maximum(n, 1e-12)
    logits = l2n(embeddings.astype(jnp.float32)) @ l2n(weights.astype(jnp.float32)).T
    if training:
        one_hot = jax.nn.one_hot(labels, weights.shape[0], dtype=logits.dtype)
        logits = (logits - margin * one_hot) * scale
    return logits


if __name__ == "__main__":
    # Small, module-consistent shapes: batch=8, embedding_size=128, classes=256.
    B, E, C = 8, 128, 256
    key = jax.random.PRNGKey(0)
    k_emb, k_w, k_lbl = jax.random.split(key, 3)

    embeddings = jax.random.normal(k_emb, (B, E), dtype=jnp.float32)
    labels = jax.random.randint(k_lbl, (B,), 0, C, dtype=jnp.int32)

    # Deterministic xavier_uniform-style init for weights (C, E).
    bound = (6.0 / (C + E)) ** 0.5
    weights = jax.random.uniform(k_w, (C, E), dtype=jnp.float32,
                                 minval=-bound, maxval=bound)

    ref_train = _reference(embeddings, labels, weights, scale=32.0, margin=0.1,
                           training=True)
    ref_eval = _reference(embeddings, labels, weights, scale=32.0, margin=0.1,
                          training=False)

    # 1) f32 path, small explicit tiles (grid = (2, 1)) to exercise the
    #    multi-tile class axis and the per-tile margin column offset: tight tol.
    out_train_f32 = cosface_margin_loss(embeddings, labels, weights,
                                        scale=32.0, margin=0.1, training=True,
                                        tile_b=8, tile_c=128, matmul_dtype=None)
    out_eval_f32 = cosface_margin_loss(embeddings, labels, weights,
                                       scale=32.0, margin=0.1, training=False,
                                       tile_b=8, tile_c=128, matmul_dtype=None)

    # 2) Default fast path: auto tiles, bf16 operands (f32 accumulation).
    out_train_bf16 = cosface_margin_loss(embeddings, labels, weights,
                                         scale=32.0, margin=0.1, training=True)
    out_eval_bf16 = cosface_margin_loss(embeddings, labels, weights,
                                        scale=32.0, margin=0.1, training=False)

    (out_train_f32, out_eval_f32, out_train_bf16, out_eval_bf16) = \
        jax.block_until_ready((out_train_f32, out_eval_f32,
                               out_train_bf16, out_eval_bf16))

    assert out_train_f32.shape == (B, C) and out_eval_f32.shape == (B, C)
    assert jnp.allclose(out_train_f32, ref_train, atol=1e-4, rtol=1e-4), \
        "train (f32) mismatch"
    assert jnp.allclose(out_eval_f32, ref_eval, atol=1e-4, rtol=1e-4), \
        "eval (f32) mismatch"
    # bf16 operands: logits span ~[-32, 32], so absolute error ~1e-1 is expected.
    assert jnp.allclose(out_train_bf16, ref_train, atol=0.25, rtol=0.0), \
        "train (bf16) mismatch"
    assert jnp.allclose(out_eval_bf16, ref_eval, atol=0.02, rtol=0.0), \
        "eval (bf16) mismatch"

    print("KERNEL_OK")
</pallas_src>

<mosaic_0001>
module attributes {stable_mosaic.version = 11 : i64} {
  func.func @_cosface_kernel(%arg0: i32, %arg1: i32, %arg2: memref<8x128xf32, #tpu.memory_space<vmem>>, %arg3: memref<128x128xf32, #tpu.memory_space<vmem>>, %arg4: memref<8x1xi32, #tpu.memory_space<vmem>>, %arg5: memref<8x128xf32, #tpu.memory_space<vmem>>) attributes {dimension_semantics = [#tpu.dimension_semantics<parallel>, #tpu.dimension_semantics<parallel>], iteration_bounds = array<i64: 2, 1>, scalar_prefetch = 0 : i64, scratch_operands = 0 : i64, tpu.core_type = #tpu.core_type<tc>, window_params = [{transform_indices = @transform_0, window_bounds = array<i64: 8, 128>}, {transform_indices = @transform_1, window_bounds = array<i64: 128, 128>}, {transform_indices = @transform_2, window_bounds = array<i64: 8, 1>}, {transform_indices = @transform_3, window_bounds = array<i64: 8, 128>}]} {
    %c0 = arith.constant 0 : index
    %c0_0 = arith.constant 0 : index
    %0 = vector.load %arg2[%c0, %c0_0] : memref<8x128xf32, #tpu.memory_space<vmem>>, vector<8x128xf32>
    %c0_1 = arith.constant 0 : index
    %c0_2 = arith.constant 0 : index
    %1 = vector.load %arg3[%c0_1, %c0_2] : memref<128x128xf32, #tpu.memory_space<vmem>>, vector<128x128xf32>
    %cst = arith.constant dense<0.000000e+00> : vector<8x128xf32>
    %2 = tpu.matmul %0, %1, %cst {dimension_numbers = #tpu.dot_dimension_numbers<[1], [1], [0], [0], [0, 0, 1, 0], [], []>} : vector<8x128xf32>, vector<128x128xf32>, vector<8x128xf32> -> vector<8x128xf32>
    %c128_i32 = arith.constant 128 : i32
    %3 = arith.muli %arg0, %c128_i32 : i32
    %c0_3 = arith.constant 0 : index
    %c0_4 = arith.constant 0 : index
    %4 = vector.load %arg4[%c0_3, %c0_4] : memref<8x1xi32, #tpu.memory_space<vmem>>, vector<8x1xi32>
    %5 = vector.broadcast %3 : i32 to vector<8x1xi32>
    %6 = arith.subi %4, %5 : vector<8x1xi32>
    %7 = tpu.iota {dimensions = array<i32: 1>} : vector<8x128xi32>
    %8 = vector.broadcast %6 : vector<8x1xi32> to vector<8x128xi32>
    %9 = arith.cmpi eq, %7, %8 : vector<8x128xi32>
    %cst_5 = arith.constant 3.200000e+00 : f32
    %cst_6 = arith.constant 0.000000e+00 : f32
    %10 = vector.broadcast %cst_5 : f32 to vector<8x128xf32>
    %11 = vector.broadcast %cst_6 : f32 to vector<8x128xf32>
    %12 = arith.select %9, %10, %11 : vector<8x128xi1>, vector<8x128xf32>
    %13 = arith.subf %2, %12 : vector<8x128xf32>
    %c0_7 = arith.constant 0 : index
    %c0_8 = arith.constant 0 : index
    %14 = vector.load %arg5[%c0_7, %c0_8] : memref<8x128xf32, #tpu.memory_space<vmem>>, vector<8x128xf32>
    tpu.vector_store %arg5[%c0_7, %c0_8], %13 {strides = array<i32>} : memref<8x128xf32, #tpu.memory_space<vmem>>, vector<8x128xf32>,
    return
  }
  func.func @transform_0(%arg0: i32, %arg1: i32) -> (i32, i32) {
    %c0_i32 = arith.constant 0 : i32
    %c0_i32_0 = arith.constant 0 : i32
    return %arg1, %c0_i32 : i32, i32
  }
  func.func @transform_1(%arg0: i32, %arg1: i32) -> (i32, i32) {
    %c0_i32 = arith.constant 0 : i32
    %c0_i32_0 = arith.constant 0 : i32
    return %arg0, %c0_i32 : i32, i32
  }
  func.func @transform_2(%arg0: i32, %arg1: i32) -> (i32, i32) {
    %c0_i32 = arith.constant 0 : i32
    %c0_i32_0 = arith.constant 0 : i32
    return %arg1, %c0_i32 : i32, i32
  }
  func.func @transform_3(%arg0: i32, %arg1: i32) -> (i32, i32) {
    %c0_i32 = arith.constant 0 : i32
    return %arg1, %arg0 : i32, i32
  }
}

</mosaic_0001>

<llo_original>
// kernel: tpu_custom_call.1
$region0: #{tpu_custom_call.1}
  #allocation0 [shape = 'u32[]', space=smem, size = 0x4, offset = 0x4, fixed_abs, tag = 'smem constant byte address 0x4 - core index']
  #allocation1 [shape = 'u32[144,128]{1,0:T(1,128)}', space=vmem, size = 0x12000, scoped, tag = 'internal scratch']
  %s0 = inlined_call_operand.vmem [shape: f32[8,128], index: 0, kind: input, shape index: {}]
  %s1 = inlined_call_operand.hbm [shape: f32[256,128], index: 1, kind: input, shape index: {}]
  %s2 = inlined_call_operand.vmem [shape: s32[8,1], index: 2, kind: input, shape index: {}]
  %s3 = inlined_call_operand.hbm [shape: f32[8,256], index: 3, kind: output, shape index: {}]
  %s4 = sld [smem:[#allocation0]]
  $region49: #{tpu_custom_call.1} parent=0
    _
  %s6 = ssub.s32 1, %s4
  %s7 = scalar_select 0, %s6, %s4
  $region1: #{tpu_custom_call.1} parent=0
    #allocation2 [shape = 'u8[131072]{0}', space=vmem, size = 0x20000, scoped, tag = 'input window, operand 1']
    #allocation3 [shape = 's32[2]{0}', space=sflag, size = 0x8, scoped, tag = 'scoped memory for tpu_custom_call.1']
    #allocation4 [shape = 's32[2]{0}', space=sflag, size = 0x8, scoped, tag = 'scoped memory for tpu_custom_call.1']
    #allocation5 [shape = 'u8[8192]{0}', space=vmem, size = 0x2000, scoped, tag = 'output window, operand 0']
    %8 = vsyncpa [#allocation3], 0
    %s9 = scalar_lea.sflag [#allocation3], 1
    %10 = vsyncpa %s9, 0
    %11 = vsyncpa [#allocation4], 0
    %s12 = scalar_lea.sflag [#allocation4], 1
    %13 = vsyncpa %s12, 0
    loop: start=0, step=1, limit=4
    $region2: #{tpu_custom_call.1} parent=1 // loop_pre_header
      _
    $region3: #{tpu_custom_call.1} parent=1 // loop_header
      %s15 = sphi 0, %s19
      %p16 = scmp.ge.s32.totalorder %s15, 4
      %s22 = sphi 0, %s34
      %s23 = sphi 0, %s30
      %s24 = sphi 0, %s22
      %s25 = sphi 0, %s23
      %s26 = sphi 0, %s24
      %s27 = sphi 0, %s25
      %s37 = sphi 0, %s39
      %s40 = sphi 0, %s37
      %s41 = sphi 0, %s40
      %s57 = sphi 0, %s41
      %s63 = sphi 0, %s65
      %s66 = sphi 0, %s63
      %s67 = sphi 0, %s66
      %s83 = sphi 0, %s67
      %s89 = sphi 0, %s91
      %s92 = sphi 0, %s89
      %s93 = sphi 0, %s92
      %s109 = sphi 0, %s93
      %s117 = sphi 0, %s119
      %s120 = sphi 0, %s117
      %s121 = sphi 0, %s120
      %s137 = sphi 0, %s121
    $region4: #{tpu_custom_call.1} parent=1 // loop_header_branch
      %18 = sbr.rel (%p16) target = $region8
    $region5: #{tpu_custom_call.1} parent=1 // loop_body
      %s20 = ssub.s32 %s15, 1
      %s21 = ssub.s32 %s15, 2
      %s28 = sadd.s32 1, %s23
      %p29 = scmp.ge.s32.totalorder %s28, 1
      %s30 = scalar_select %p29, 0, %s28
      %s31 = sadd.s32 1, %s22
      %s32 = scalar_select %p29, %s31, %s22
      %p33 = scmp.ge.s32.totalorder %s32, 2
      %s34 = scalar_select %p33, 0, %s32
      %s35 = ssub.s32 %s23, %s30
      %p36 = scmp.eq.s32.totalorder %s35, 0
      %s38 = sadd.s32 %s37, 1
      %s39 = scalar_select %p36, %s37, %s38
      %p42 = pneg %p36
      %p43 = scmp.eq.s32.totalorder %s15, 1
      %p44 = por %p42, %p43
      %p45 = scmp.ne.s32.totalorder %s37, %s40
      %p46 = scmp.eq.s32.totalorder %s15, 0
      %p47 = por %p45, %p46
      %p48 = scmp.ne.s32.totalorder %s37, %s40
      %p49 = scmp.eq.s32.totalorder %s20, 1
      %p50 = por %p48, %p49
      %p51 = scmp.ne.s32.totalorder %s40, %s41
      %p52 = scmp.eq.s32.totalorder %s20, 0
      %p53 = por %p51, %p52
      %p54 = scmp.ne.s32.totalorder %s40, %s41
      %p55 = scmp.eq.s32.totalorder %s21, 1
      %p56 = por %p54, %p55
      %p58 = scmp.ne.s32.totalorder %s41, %s57
      %p59 = scmp.eq.s32.totalorder %s21, 0
      %p60 = por %p58, %p59
      %s61 = ssub.s32 %s22, %s34
      %p62 = scmp.eq.s32.totalorder %s61, 0
      %s64 = sadd.s32 %s63, 1
      %s65 = scalar_select %p62, %s63, %s64
      %p68 = pneg %p62
      %p69 = scmp.eq.s32.totalorder %s15, 1
      %p70 = por %p68, %p69
      %p71 = scmp.ne.s32.totalorder %s63, %s66
      %p72 = scmp.eq.s32.totalorder %s15, 0
      %p73 = por %p71, %p72
      %p74 = scmp.ne.s32.totalorder %s63, %s66
      %p75 = scmp.eq.s32.totalorder %s20, 1
      %p76 = por %p74, %p75
      %p77 = scmp.ne.s32.totalorder %s66, %s67
      %p78 = scmp.eq.s32.totalorder %s20, 0
      %p79 = por %p77, %p78
      %p80 = scmp.ne.s32.totalorder %s66, %s67
      %p81 = scmp.eq.s32.totalorder %s21, 1
      %p82 = por %p80, %p81
      %p84 = scmp.ne.s32.totalorder %s67, %s83
      %p85 = scmp.eq.s32.totalorder %s21, 0
      %p86 = por %p84, %p85
      %s87 = ssub.s32 %s23, %s30
      %p88 = scmp.eq.s32.totalorder %s87, 0
      %s90 = sadd.s32 %s89, 1
      %s91 = scalar_select %p88, %s89, %s90
      %p94 = pneg %p88
      %p95 = scmp.eq.s32.totalorder %s15, 1
      %p96 = por %p94, %p95
      %p97 = scmp.ne.s32.totalorder %s89, %s92
      %p98 = scmp.eq.s32.totalorder %s15, 0
      %p99 = por %p97, %p98
      %p100 = scmp.ne.s32.totalorder %s89, %s92
      %p101 = scmp.eq.s32.totalorder %s20, 1
      %p102 = por %p100, %p101
      %p103 = scmp.ne.s32.totalorder %s92, %s93
      %p104 = scmp.eq.s32.totalorder %s20, 0
      %p105 = por %p103, %p104
      %p106 = scmp.ne.s32.totalorder %s92, %s93
      %p107 = scmp.eq.s32.totalorder %s21, 1
      %p108 = por %p106, %p107
      %p110 = scmp.ne.s32.totalorder %s93, %s109
      %p111 = scmp.eq.s32.totalorder %s21, 0
      %p112 = por %p110, %p111
      %s113 = ssub.s32 %s23, %s30
      %s114 = ssub.s32 %s22, %s34
      %s115 = sor.u32 %s113, %s114
      %p116 = scmp.eq.s32.totalorder %s115, 0
      %s118 = sadd.s32 %s117, 1
      %s119 = scalar_select %p116, %s117, %s118
      %p122 = pneg %p116
      %p123 = scmp.eq.s32.totalorder %s15, 1
      %p124 = por %p122, %p123
      %p125 = scmp.ne.s32.totalorder %s117, %s120
      %p126 = scmp.eq.s32.totalorder %s15, 0
      %p127 = por %p125, %p126
      %p128 = scmp.ne.s32.totalorder %s117, %s120
      %p129 = scmp.eq.s32.totalorder %s20, 1
      %p130 = por %p128, %p129
      %p131 = scmp.ne.s32.totalorder %s120, %s121
      %p132 = scmp.eq.s32.totalorder %s20, 0
      %p133 = por %p131, %p132
      %p134 = scmp.ne.s32.totalorder %s120, %s121
      %p135 = scmp.eq.s32.totalorder %s21, 1
      %p136 = por %p134, %p135
      %p138 = scmp.ne.s32.totalorder %s121, %s137
      %p139 = scmp.eq.s32.totalorder %s21, 0
      %p140 = por %p138, %p139
      %p141 = scmp.le.s32.totalorder 1, %s15
      %p142 = scmp.lt.s32.totalorder %s15, 3
      %p143 = pnand %p141, %p142
      %p144 = pneg %p143
      // Predicated region
      $region9: #{tpu_custom_call.1} parent=5 // pred_check
        _
      $region10: #{tpu_custom_call.1} parent=5 // pred_check_branch
        %146 = sbr.rel (%p143) target = $region12
      $region11: #{tpu_custom_call.1} parent=5 // pred_region
        %s147 = ssub.s32 %s15, 1
        // Predicated region
        $region13: #{tpu_custom_call.1} parent=11 // pred_check
          %p148 = pneg %p53
        $region14: #{tpu_custom_call.1} parent=11 // pred_check_branch
          %150 = sbr.rel (%p148) target = $region16
        $region15: #{tpu_custom_call.1} parent=11 // pred_region
          %p151 = scmp.lt.s32.totalorder %s25, 0
          %s152 = scalar_select %p151, %s25, 0
          %s153 = smul.addr %s152, 8
          %s154 = scalar_lea.vmem %s0, %s153
        $region16: #{tpu_custom_call.1} parent=11 // pred_fallthru
          _
        // Predicated region
        $region17: #{tpu_custom_call.1} parent=11 // pred_check
          %p155 = pneg %p105
        $region18: #{tpu_custom_call.1} parent=11 // pred_check_branch
          %157 = sbr.rel (%p155) target = $region20
        $region19: #{tpu_custom_call.1} parent=11 // pred_region
          %p158 = scmp.lt.s32.totalorder %s25, 0
          %s159 = scalar_select %p158, %s25, 0
          %s160 = smul.addr %s159, 8
          %s161 = scalar_lea.vmem %s2, %s160
        $region20: #{tpu_custom_call.1} parent=11 // pred_fallthru
          _
      $region12: #{tpu_custom_call.1} parent=5 // pred_fallthru
        _
      %p162 = scmp.lt.s32.totalorder %s15, 2
      // Predicated region
      $region21: #{tpu_custom_call.1} parent=5 // pred_check
        %p163 = pneg %p162
      $region22: #{tpu_custom_call.1} parent=5 // pred_check_branch
        %165 = sbr.rel (%p163) target = $region24
      $region23: #{tpu_custom_call.1} parent=5 // pred_region
        // Predicated region
        $region25: #{tpu_custom_call.1} parent=23 // pred_check
          %p166 = pneg %p73
        $region26: #{tpu_custom_call.1} parent=23 // pred_check_branch
          %168 = sbr.rel (%p166) target = $region28
        $region27: #{tpu_custom_call.1} parent=23 // pred_region
          %s169 = sand.u32 %s63, 1
          %s170 = scalar_lea.sflag [#allocation3], %s169
          %s171 = sand.u32 %s63, 1
          %s172 = smul.addr %s171, 128
          %s173 = scalar_lea.vmem [#allocation2], %s172
          %s174 = smul.u32 16, %s22
          %s176 = ssub.s32 2048, 2048
          %177 = vsyncadd %s170, %s176
          %s178 = smul.addr %s174, 128
          %s179 = scalar_lea.hbm %s1, %s178
          %s180 = sshll.u32 %s173, 4
          %s181 = int_to_ptr.vmem [resolvable:$true] %s180
          %186 = dma.hbm_to_vmem [thread:$0]  %s179, 2048, %s181, %s170, 128, 128, 8
        $region28: #{tpu_custom_call.1} parent=23 // pred_fallthru
          _
      $region24: #{tpu_custom_call.1} parent=5 // pred_fallthru
        _
      %p187 = scmp.le.s32.totalorder 1, %s15
      %p188 = scmp.lt.s32.totalorder %s15, 3
      %p189 = pnand %p187, %p188
      %p190 = pneg %p189
      // Predicated region
      $region29: #{tpu_custom_call.1} parent=5 // pred_check
        _
      $region30: #{tpu_custom_call.1} parent=5 // pred_check_branch
        %192 = sbr.rel (%p189) target = $region32
      $region31: #{tpu_custom_call.1} parent=5 // pred_region
        %s193 = ssub.s32 %s15, 1
        %s194 = sand.u32 %s66, 1
        %s195 = scalar_lea.sflag [#allocation3], %s194
        %s196 = sand.u32 %s66, 1
        %s197 = smul.addr %s196, 128
        %s198 = scalar_lea.vmem [#allocation2], %s197
        // Predicated region
        $region33: #{tpu_custom_call.1} parent=31 // pred_check
          %p199 = pneg %p79
        $region34: #{tpu_custom_call.1} parent=31 // pred_check_branch
          %201 = sbr.rel (%p199) target = $region36
        $region35: #{tpu_custom_call.1} parent=31 // pred_region
          %202 = dma.done %s195, 2048
        $region36: #{tpu_custom_call.1} parent=31 // pred_fallthru
          _
        %p203 = scmp.lt.s32.totalorder %s25, 0
        %s204 = scalar_select %p203, %s25, 0
        %s205 = smul.addr %s204, 8
        %s206 = scalar_lea.vmem %s0, %s205
        %p207 = pneg %p53
        %p208 = pneg %p50
        %s209 = sand.u32 %s66, 1
        %s210 = scalar_lea.sflag [#allocation3], %s209
        %s211 = sand.u32 %s66, 1
        %s212 = smul.addr %s211, 128
        %s213 = scalar_lea.vmem [#allocation2], %s212
        %p214 = pneg %p79
        %p215 = pneg %p76
        %p216 = scmp.lt.s32.totalorder %s25, 0
        %s217 = scalar_select %p216, %s25, 0
        %s218 = smul.addr %s217, 8
        %s219 = scalar_lea.vmem %s2, %s218
        %p220 = pneg %p105
        %p221 = pneg %p102
        %p222 = pneg %p133
        %p223 = pneg %p130
        %s224 = sand.u32 %s120, 1
        %s225 = scalar_lea.sflag [#allocation4], %s224
        %s226 = sand.u32 %s120, 1
        %s227 = smul.addr %s226, 8
        %s228 = scalar_lea.vmem [#allocation5], %s227
        %p229 = scmp.lt.s32.totalorder %s25, 0
        %s230 = scalar_select %p229, %s25, 0
        %s231 = smul.addr %s230, 8
        %s232 = scalar_lea.vmem %s0, %s231
        %s233 = smul.u32 16, %s24
        %p234 = scmp.lt.s32.totalorder %s25, 0
        %s235 = scalar_select %p234, %s25, 0
        %s236 = smul.addr %s235, 8
        %s237 = scalar_lea.vmem %s2, %s236
        %v238 = vld [vmem:[%s232] sm:$0xff]
        %v239 = vld [vmem:[%s198] sm:$0xff]
        %v240 = vld [vmem:[%s198 + $0x8] sm:$0xff]
        %v241 = vld [vmem:[%s198 + $0x10] sm:$0xff]
        %v242 = vld [vmem:[%s198 + $0x18] sm:$0xff]
        %v243 = vld [vmem:[%s198 + $0x20] sm:$0xff]
        %v244 = vld [vmem:[%s198 + $0x28] sm:$0xff]
        %v245 = vld [vmem:[%s198 + $0x30] sm:$0xff]
        %v246 = vld [vmem:[%s198 + $0x38] sm:$0xff]
        %v247 = vld [vmem:[%s198 + $0x40] sm:$0xff]
        %v248 = vld [vmem:[%s198 + $0x48] sm:$0xff]
        %v249 = vld [vmem:[%s198 + $0x50] sm:$0xff]
        %v250 = vld [vmem:[%s198 + $0x58] sm:$0xff]
        %v251 = vld [vmem:[%s198 + $0x60] sm:$0xff]
        %v252 = vld [vmem:[%s198 + $0x68] sm:$0xff]
        %v253 = vld [vmem:[%s198 + $0x70] sm:$0xff]
        %v254 = vld [vmem:[%s198 + $0x78] sm:$0xff]
        %255 = vmatprep.subr.mxu0 0.0
        %256 = vmatpush1.xpose.msra.mxu0 %v239
        %257 = vmatprep.subr.mxu0 0.0
        %258 = vmatpush1.xpose.msra.mxu0 %v240
        %259 = vmatprep.subr.mxu0 0.0
        %260 = vmatpush1.xpose.msra.mxu0 %v241
        %261 = vmatprep.subr.mxu0 0.0
        %262 = vmatpush1.xpose.msra.mxu0 %v242
        %263 = vmatprep.subr.mxu0 0.0
        %264 = vmatpush1.xpose.msra.mxu0 %v243
        %265 = vmatprep.subr.mxu0 0.0
        %266 = vmatpush1.xpose.msra.mxu0 %v244
        %267 = vmatprep.subr.mxu0 0.0
        %268 = vmatpush1.xpose.msra.mxu0 %v245
        %269 = vmatprep.subr.mxu0 0.0
        %270 = vmatpush1.xpose.msra.mxu0 %v246
        %271 = vmatprep.subr.mxu0 0.0
        %272 = vmatpush1.xpose.msra.mxu0 %v247
        %273 = vmatprep.subr.mxu0 0.0
        %274 = vmatpush1.xpose.msra.mxu0 %v248
        %275 = vmatprep.subr.mxu0 0.0
        %276 = vmatpush1.xpose.msra.mxu0 %v249
        %277 = vmatprep.subr.mxu0 0.0
        %278 = vmatpush1.xpose.msra.mxu0 %v250
        %279 = vmatprep.subr.mxu0 0.0
        %280 = vmatpush1.xpose.msra.mxu0 %v251
        %281 = vmatprep.subr.mxu0 0.0
        %282 = vmatpush1.xpose.msra.mxu0 %v252
        %283 = vmatprep.subr.mxu0 0.0
        %284 = vmatpush1.xpose.msra.mxu0 %v253
        %285 = vmatprep.subr.mxu0 0.0
        %286 = vmatpush1.xpose.msra.mxu0 %v254
        %287 = vmatprep.subr.mxu0 0.0
        %288 = vmatpush1.xpose.msra.mxu0 0.0
        %289 = vmatprep.subr.mxu0 0.0
        %290 = vmatpush1.xpose.msra.mxu0 0.0
        %291 = vmatprep.subr.mxu0 0.0
        %292 = vmatpush1.xpose.msra.mxu0 0.0
        %293 = vmatprep.subr.mxu0 0.0
        %294 = vmatpush1.xpose.msra.mxu0 0.0
        %295 = vmatprep.subr.mxu0 0.0
        %296 = vmatpush1.xpose.msra.mxu0 0.0
        %297 = vmatprep.subr.mxu0 0.0
        %298 = vmatpush1.xpose.msra.mxu0 0.0
        %299 = vmatprep.subr.mxu0 0.0
        %300 = vmatpush1.xpose.msra.mxu0 0.0
        %301 = vmatprep.subr.mxu0 0.0
        %302 = vmatpush1.xpose.msra.mxu0 0.0
        %303 = vmatprep.subr.mxu0 0.0
        %304 = vmatpush1.xpose.msra.mxu0 0.0
        %305 = vmatprep.subr.mxu0 0.0
        %306 = vmatpush1.xpose.msra.mxu0 0.0
        %307 = vmatprep.subr.mxu0 0.0
        %308 = vmatpush1.xpose.msra.mxu0 0.0
        %309 = vmatprep.subr.mxu0 0.0
        %310 = vmatpush1.xpose.msra.mxu0 0.0
        %311 = vmatprep.subr.mxu0 0.0
        %312 = vmatpush1.xpose.msra.mxu0 0.0
        %313 = vmatprep.subr.mxu0 0.0
        %314 = vmatpush1.xpose.msra.mxu0 0.0
        %315 = vmatprep.subr.mxu0 0.0
        %316 = vmatpush1.xpose.msra.mxu0 0.0
        %317 = vmatprep.subr.mxu0 0.0
        %318 = vmatpush1.xpose.msra.mxu0 0.0
        %319 = vmatprep.mubr.f32.mxu0 0.0
        %320 = vmatmul.mubr.f32.gmra.mrb[0].mxu0 %v238
        %v321 = vpop.f32.mrb[0].mxu0
        %v322 = vadd.f32 0.0, %v321
        %v323 = vpop.f32.mrb[0].mxu0
        %324 = vdwg.mxu0
        %s325 = smul.u32 %s24, 128
        %v326 = vld [vmem:[%s237] sm:$0xff]
        %v327 = vstv %s325
        %v328 = vsub.s32 %v326, %v327
        %v329 = vlaneseq
        %v330 = vand.u32 %v329, 127
        %331 = vset.pattern.permute.xlu0 0
        %332 = vperm.xlu0 %331, %v328
        %v333 = vpop.permute.xlu0 %332
        %vm334 = vcmp.eq.s32.totalorder %v330, %v333
        %v335 = vsel %vm334, 3.2, 0.0
        %v336 = vsub.f32 %v322, %v335
        %337 = vst [vmem:[%s228] sm:$0xff] %v336
        %s338 = sand.u32 %s120, 1
        %s339 = scalar_lea.sflag [#allocation4], %s338
        %s340 = sand.u32 %s120, 1
        %s341 = smul.addr %s340, 8
        %s342 = scalar_lea.vmem [#allocation5], %s341
        // Predicated region
        $region37: #{tpu_custom_call.1} parent=31 // pred_check
          %p343 = pneg %p130
        $region38: #{tpu_custom_call.1} parent=31 // pred_check_branch
          %345 = sbr.rel (%p343) target = $region40
        $region39: #{tpu_custom_call.1} parent=31 // pred_region
          %s347 = ssub.s32 128, 128
          %348 = vsyncadd %s339, %s347
          %s349 = smul.addr %s25, 2
          %s350 = sadd.s32 %s24, %s349
          %s351 = smul.addr %s350, 128
          %s352 = scalar_lea.hbm %s3, %s351
          %s354 = sshll.u32 %s342, 4
          %s355 = int_to_ptr.vmem [resolvable:$true] %s354
          %357 = dma.vmem_to_hbm [thread:$0]  %s355, 128, %s352, %s339
        $region40: #{tpu_custom_call.1} parent=31 // pred_fallthru
          _
      $region32: #{tpu_custom_call.1} parent=5 // pred_fallthru
        _
      %p358 = scmp.le.s32.totalorder 2, %s15
      // Predicated region
      $region41: #{tpu_custom_call.1} parent=5 // pred_check
        %p359 = pneg %p358
      $region42: #{tpu_custom_call.1} parent=5 // pred_check_branch
        %361 = sbr.rel (%p359) target = $region44
      $region43: #{tpu_custom_call.1} parent=5 // pred_region
        %s362 = ssub.s32 %s15, 2
        // Predicated region
        $region45: #{tpu_custom_call.1} parent=43 // pred_check
          %p363 = pneg %p136
        $region46: #{tpu_custom_call.1} parent=43 // pred_check_branch
          %365 = sbr.rel (%p363) target = $region48
        $region47: #{tpu_custom_call.1} parent=43 // pred_region
          %s366 = sand.u32 %s121, 1
          %s367 = scalar_lea.sflag [#allocation4], %s366
          %s368 = sand.u32 %s121, 1
          %s369 = smul.addr %s368, 8
          %s370 = scalar_lea.vmem [#allocation5], %s369
          %371 = dma.done %s367, 128
        $region48: #{tpu_custom_call.1} parent=43 // pred_fallthru
          _
      $region44: #{tpu_custom_call.1} parent=5 // pred_fallthru
        _
    $region6: #{tpu_custom_call.1} parent=1 // loop_footer
      %s19 = sadd.s32 1, %s15
    $region7: #{tpu_custom_call.1} parent=1 // loop_footer_branch
      %14 = sbr.rel target = $region3
    $region8: #{tpu_custom_call.1} parent=1 // loop_exit
      _
    %372 = vsyncpa [#allocation3], 1
    %s373 = scalar_lea.sflag [#allocation3], 1
    %374 = vsyncpa %s373, 1
    %375 = vsyncpa [#allocation4], 1
    %s376 = scalar_lea.sflag [#allocation4], 1
    %377 = vsyncpa %s376, 1

</llo_original>
